<compile_context>
chip_gen: v7x
topology: tpu7x:2x2x1
jax: 0.10.0
libtpu: 0.0.40
codegen_flags: <defaults>
</compile_context>

<pallas_src>
import functools

import jax
import jax.numpy as jnp
import numpy as np
from jax import lax
from jax.experimental import pallas as pl
from jax.experimental.pallas import tpu as pltpu


def _attn_kernel(q_ref, k_ref, v_ref, mask_ref, out_ref, w_ref, *, scale):
    """One grid step: G (batch*head) slices x one tile of TQ query rows.

    Kernel-side shapes:
      q_ref    (G, TQ, Dq)
      k_ref    (G, Nk, Dq)
      v_ref    (G, Nk, Dv)
      mask_ref (G, TQ, Nk) bool, True => masked with -1e9
      out_ref  (G, TQ, Dv)
      w_ref    (G, TQ, Nk)
    """
    # Scale q (G*TQ*Dq elements) instead of the scores (G*TQ*Nk elements).
    q = q_ref[...] * jnp.asarray(scale, dtype=q_ref.dtype)
    k = k_ref[...]
    v = v_ref[...]

    # scores[g, q, n] = sum_d q[g, q, d] * k[g, n, d]
    # Contract on the last dim of both operands: no k.T relayout; MXU-direct;
    # f32 accumulation even for bf16 inputs.
    scores = lax.dot_general(
        q, k,
        dimension_numbers=(((2,), (2,)), ((0,), (0,))),
        preferred_element_type=jnp.float32)

    # masked_fill_(mask, -1e9)
    scores = jnp.where(mask_ref[...], jnp.float32(-1000000000.0), scores)

    # Numerically-stable softmax over the key axis. The full Nk row is
    # resident, so this is exact — no online softmax needed.
    m = jnp.max(scores, axis=-1, keepdims=True)
    e = jnp.exp(scores - m)
    denom = jnp.sum(e, axis=-1, keepdims=True)
    weights = e * pl.reciprocal(denom, approx=False)

    # outputs[g, q, d] = sum_n weights[g, q, n] * v[g, n, d]
    out = lax.dot_general(
        weights.astype(v.dtype), v,
        dimension_numbers=(((2,), (1,)), ((0,), (0,))),
        preferred_element_type=jnp.float32)

    w_ref[...] = weights.astype(w_ref.dtype)
    out_ref[...] = out.astype(out_ref.dtype)


def _largest_divisor_leq(n, cap):
    cap = max(1, min(n, cap))
    for d in range(cap, 0, -1):
        if n % d == 0:
            return d
    return 1


def _choose_tiles(BH, Nq, Nk, Dq, Dv, itemsize):
    """Pick (G = heads per step, TQ = query rows per step).

    Budget ~6 MiB of live blocks per grid step so double-buffering stays well
    under the 32 MiB scoped-VMEM default on all generations (and under v7x's
    64 MiB physical VMEM).
    """
    budget = 6 << 20

    # Query-row tile: full extent when small, otherwise a 128-multiple divisor
    # (fills the MXU on v5e's 128-wide arrays too; 256 cap is v7x-friendly).
    if Nq <= 256:
        tq = Nq
    elif Nq % 256 == 0:
        tq = 256
    elif Nq % 128 == 0:
        tq = 128
    else:
        tq = _largest_divisor_leq(Nq, 256)

    def step_bytes(g):
        per_head = (tq * Dq + Nk * (Dq + Dv) + tq * Dv) * itemsize  # q, k, v, out
        per_head += tq * Nk * (1 + itemsize)                        # mask + weights
        per_head += tq * Nk * 4 * 2                                 # f32 scores/exp temps
        return 2 * g * per_head                                     # double-buffered

    # Heads per step: largest divisor of BH that fits the budget while leaving
    # >= 2 steps on the head-group axis (so megacore / v7x dual-TC can shard).
    g = 1
    for cand in range(BH, 0, -1):
        if BH % cand:
            continue
        if step_bytes(cand) > budget:
            continue
        if BH // cand >= 2 or BH == 1:
            g = cand
            break
    return g, tq


def scaled_product_attention_softmax(q, k, v, attention_mask, d_q):
    """Pallas TPU equivalent of ScaledProductAttentionSoftmax.forward."""
    B, H, Nq, Dq = q.shape
    Nk = k.shape[2]
    Dv = v.shape[3]
    BH = B * H

    q_f = q.reshape(BH, Nq, Dq)
    k_f = k.reshape(BH, Nk, Dq)
    v_f = v.reshape(BH, Nk, Dv)
    m_f = attention_mask.reshape(BH, Nq, Nk).astype(jnp.bool_)

    G, TQ = _choose_tiles(BH, Nq, Nk, Dq, Dv, q.dtype.itemsize)
    grid = (BH // G, Nq // TQ)  # q-tile axis last: k/v block index is unchanged
    #                             across consecutive steps -> no redundant DMA.

    scale = float(1.0 / np.sqrt(d_q))
    kernel = functools.partial(_attn_kernel, scale=scale)

    # TODO(synk): for tiny Dv/Nk (<128 lanes) the output stores are masked
    # partial stores; folding heads into the last dim would need a relayout in
    # the wrapper, so the standard (B, H, Nq, ·) layout is kept.
    out_f, w_f = pl.pallas_call(
        kernel,
        out_shape=(
            jax.ShapeDtypeStruct((BH, Nq, Dv), q.dtype),
            jax.ShapeDtypeStruct((BH, Nq, Nk), q.dtype),
        ),
        grid_spec=pltpu.PrefetchScalarGridSpec(
            num_scalar_prefetch=0,
            grid=grid,
            in_specs=[
                pl.BlockSpec((G, TQ, Dq), lambda g, t: (g, t, 0)),
                pl.BlockSpec((G, Nk, Dq), lambda g, t: (g, 0, 0)),
                pl.BlockSpec((G, Nk, Dv), lambda g, t: (g, 0, 0)),
                pl.BlockSpec((G, TQ, Nk), lambda g, t: (g, t, 0)),
            ],
            out_specs=[
                pl.BlockSpec((G, TQ, Dv), lambda g, t: (g, t, 0)),
                pl.BlockSpec((G, TQ, Nk), lambda g, t: (g, t, 0)),
            ],
        ),
        compiler_params=pltpu.CompilerParams(
            dimension_semantics=("parallel", "parallel")),
    )(q_f, k_f, v_f, m_f)

    outputs = out_f.reshape(B, H, Nq, Dv)
    attention_weights = w_f.reshape(B, H, Nq, Nk)
    return outputs, attention_weights


def _reference(q, k, v, attention_mask, d_q):
    """Pure-JAX reference mirroring the PyTorch forward exactly."""
    scores = jnp.einsum("bhqd,bhkd->bhqk", q, k) / np.sqrt(d_q)
    scores = jnp.where(attention_mask, -1000000000.0, scores)
    weights = jax.nn.softmax(scores, axis=-1)
    outputs = jnp.einsum("bhqk,bhkd->bhqd", weights, v)
    return outputs, weights


if __name__ == "__main__":
    # Small shapes consistent with the module's forward signature.
    B, H, Nq, Nk, Dq, Dv = 2, 4, 8, 8, 32, 32
    d_q = Dq

    key = jax.random.PRNGKey(0)
    kq, kk, kv, km = jax.random.split(key, 4)
    q = jax.random.normal(kq, (B, H, Nq, Dq), dtype=jnp.float32)
    k = jax.random.normal(kk, (B, H, Nk, Dq), dtype=jnp.float32)
    v = jax.random.normal(kv, (B, H, Nk, Dv), dtype=jnp.float32)
    attention_mask = jax.random.bernoulli(km, 0.25, (B, H, Nq, Nk))

    out, w = scaled_product_attention_softmax(q, k, v, attention_mask, d_q)
    out = jax.block_until_ready(out)
    w = jax.block_until_ready(w)

    out_ref, w_ref = _reference(q, k, v, attention_mask, d_q)
    np.testing.assert_allclose(np.asarray(out), np.asarray(out_ref),
                               rtol=1e-5, atol=1e-5)
    np.testing.assert_allclose(np.asarray(w), np.asarray(w_ref),
                               rtol=1e-5, atol=1e-5)

    print("KERNEL_OK")
</pallas_src>

<mosaic_0001>
module attributes {stable_mosaic.version = 11 : i64} {
  func.func @_attn_kernel(%arg0: i32, %arg1: i32, %arg2: memref<4x8x32xf32, #tpu.memory_space<vmem>>, %arg3: memref<4x8x32xf32, #tpu.memory_space<vmem>>, %arg4: memref<4x8x32xf32, #tpu.memory_space<vmem>>, %arg5: memref<4x8x8xi32, #tpu.memory_space<vmem>>, %arg6: memref<4x8x32xf32, #tpu.memory_space<vmem>>, %arg7: memref<4x8x8xf32, #tpu.memory_space<vmem>>) attributes {dimension_semantics = [#tpu.dimension_semantics<parallel>, #tpu.dimension_semantics<parallel>], iteration_bounds = array<i64: 2, 1>, scalar_prefetch = 0 : i64, scratch_operands = 0 : i64, tpu.core_type = #tpu.core_type<tc>, window_params = [{transform_indices = @transform_0, window_bounds = array<i64: 4, 8, 32>}, {transform_indices = @transform_1, window_bounds = array<i64: 4, 8, 32>}, {transform_indices = @transform_2, window_bounds = array<i64: 4, 8, 32>}, {transform_indices = @transform_3, window_bounds = array<i64: 4, 8, 8>}, {transform_indices = @transform_4, window_bounds = array<i64: 4, 8, 32>}, {transform_indices = @transform_5, window_bounds = array<i64: 4, 8, 8>}]} {
    %c0 = arith.constant 0 : index
    %c0_0 = arith.constant 0 : index
    %c0_1 = arith.constant 0 : index
    %0 = vector.load %arg2[%c0, %c0_0, %c0_1] : memref<4x8x32xf32, #tpu.memory_space<vmem>>, vector<4x8x32xf32>
    %cst = arith.constant 0.176776692 : f32
    %1 = vector.broadcast %cst : f32 to vector<4x8x32xf32>
    %2 = arith.mulf %0, %1 : vector<4x8x32xf32>
    %c0_2 = arith.constant 0 : index
    %c0_3 = arith.constant 0 : index
    %c0_4 = arith.constant 0 : index
    %3 = vector.load %arg3[%c0_2, %c0_3, %c0_4] : memref<4x8x32xf32, #tpu.memory_space<vmem>>, vector<4x8x32xf32>
    %c0_5 = arith.constant 0 : index
    %c0_6 = arith.constant 0 : index
    %c0_7 = arith.constant 0 : index
    %4 = vector.load %arg4[%c0_5, %c0_6, %c0_7] : memref<4x8x32xf32, #tpu.memory_space<vmem>>, vector<4x8x32xf32>
    %cst_8 = arith.constant dense<0.000000e+00> : vector<4x8x8xf32>
    %5 = tpu.matmul %2, %3, %cst_8 {dimension_numbers = #tpu.dot_dimension_numbers<[2], [2], [1], [1], [0, 0, 0, 1, 1, 1], [0], [0]>} : vector<4x8x32xf32>, vector<4x8x32xf32>, vector<4x8x8xf32> -> vector<4x8x8xf32>
    %c0_9 = arith.constant 0 : index
    %c0_10 = arith.constant 0 : index
    %c0_11 = arith.constant 0 : index
    %6 = vector.load %arg5[%c0_9, %c0_10, %c0_11] : memref<4x8x8xi32, #tpu.memory_space<vmem>>, vector<4x8x8xi32>
    %cst_12 = arith.constant dense<0> : vector<4x8x8xi32>
    %7 = arith.cmpi ne, %6, %cst_12 : vector<4x8x8xi32>
    %cst_13 = arith.constant -1.000000e+09 : f32
    %8 = vector.broadcast %cst_13 : f32 to vector<4x8x8xf32>
    %9 = arith.select %7, %8, %5 : vector<4x8x8xi1>, vector<4x8x8xf32>
    %cst_14 = arith.constant dense<0xFF800000> : vector<4x8xf32>
    %10 = vector.multi_reduction <maximumf>, %9, %cst_14 [2] : vector<4x8x8xf32> to vector<4x8xf32>
    %11 = vector.shape_cast %10 : vector<4x8xf32> to vector<4x8x1xf32>
    %12 = vector.broadcast %11 : vector<4x8x1xf32> to vector<4x8x8xf32>
    %13 = arith.subf %9, %12 : vector<4x8x8xf32>
    %14 = math.exp %13 : vector<4x8x8xf32>
    %cst_15 = arith.constant dense<0.000000e+00> : vector<4x8xf32>
    %15 = vector.multi_reduction <add>, %14, %cst_15 [2] : vector<4x8x8xf32> to vector<4x8xf32>
    %16 = vector.shape_cast %15 : vector<4x8xf32> to vector<4x8x1xf32>
    %17 = tpu.reciprocal %16 : vector<4x8x1xf32> -> vector<4x8x1xf32>
    %18 = vector.broadcast %17 : vector<4x8x1xf32> to vector<4x8x8xf32>
    %19 = arith.mulf %14, %18 : vector<4x8x8xf32>
    %cst_16 = arith.constant dense<0.000000e+00> : vector<4x8x32xf32>
    %20 = tpu.matmul %19, %4, %cst_16 {dimension_numbers = #tpu.dot_dimension_numbers<[2], [1], [1], [2], [0, 0, 0, 1, 1, 2], [0], [0]>} : vector<4x8x8xf32>, vector<4x8x32xf32>, vector<4x8x32xf32> -> vector<4x8x32xf32>
    %c0_17 = arith.constant 0 : index
    %c0_18 = arith.constant 0 : index
    %c0_19 = arith.constant 0 : index
    %21 = vector.load %arg7[%c0_17, %c0_18, %c0_19] : memref<4x8x8xf32, #tpu.memory_space<vmem>>, vector<4x8x8xf32>
    tpu.vector_store %arg7[%c0_17, %c0_18, %c0_19], %19 {strides = array<i32>} : memref<4x8x8xf32, #tpu.memory_space<vmem>>, vector<4x8x8xf32>,
    %c0_20 = arith.constant 0 : index
    %c0_21 = arith.constant 0 : index
    %c0_22 = arith.constant 0 : index
    %22 = vector.load %arg6[%c0_20, %c0_21, %c0_22] : memref<4x8x32xf32, #tpu.memory_space<vmem>>, vector<4x8x32xf32>
    tpu.vector_store %arg6[%c0_20, %c0_21, %c0_22], %20 {strides = array<i32>} : memref<4x8x32xf32, #tpu.memory_space<vmem>>, vector<4x8x32xf32>,
    return
  }
  func.func @transform_0(%arg0: i32, %arg1: i32) -> (i32, i32, i32) {
    %c0_i32 = arith.constant 0 : i32
    %c0_i32_0 = arith.constant 0 : i32
    return %arg0, %arg1, %c0_i32 : i32, i32, i32
  }
  func.func @transform_1(%arg0: i32, %arg1: i32) -> (i32, i32, i32) {
    %c0_i32 = arith.constant 0 : i32
    %c0_i32_0 = arith.constant 0 : i32
    %c0_i32_1 = arith.constant 0 : i32
    return %arg0, %c0_i32, %c0_i32_0 : i32, i32, i32
  }
  func.func @transform_2(%arg0: i32, %arg1: i32) -> (i32, i32, i32) {
    %c0_i32 = arith.constant 0 : i32
    %c0_i32_0 = arith.constant 0 : i32
    %c0_i32_1 = arith.constant 0 : i32
    return %arg0, %c0_i32, %c0_i32_0 : i32, i32, i32
  }
  func.func @transform_3(%arg0: i32, %arg1: i32) -> (i32, i32, i32) {
    %c0_i32 = arith.constant 0 : i32
    %c0_i32_0 = arith.constant 0 : i32
    return %arg0, %arg1, %c0_i32 : i32, i32, i32
  }
  func.func @transform_4(%arg0: i32, %arg1: i32) -> (i32, i32, i32) {
    %c0_i32 = arith.constant 0 : i32
    %c0_i32_0 = arith.constant 0 : i32
    return %arg0, %arg1, %c0_i32 : i32, i32, i32
  }
  func.func @transform_5(%arg0: i32, %arg1: i32) -> (i32, i32, i32) {
    %c0_i32 = arith.constant 0 : i32
    %c0_i32_0 = arith.constant 0 : i32
    return %arg0, %arg1, %c0_i32 : i32, i32, i32
  }
}

</mosaic_0001>

<llo_original>
// kernel: tpu_custom_call.1
$region0: #{tpu_custom_call.1}
  #allocation0 [shape = 'u32[]', space=smem, size = 0x4, offset = 0x4, fixed_abs, tag = 'smem constant byte address 0x4 - core index']
  #allocation1 [shape = 'u32[144,128]{1,0:T(1,128)}', space=vmem, size = 0x12000, scoped, tag = 'internal scratch']
  %s0 = inlined_call_operand.vmem [shape: f32[8,8,32], index: 0, kind: input, shape index: {}]
  %s1 = inlined_call_operand.hbm [shape: f32[8,8,32], index: 1, kind: input, shape index: {}]
  %s2 = inlined_call_operand.hbm [shape: f32[8,8,32], index: 2, kind: input, shape index: {}]
  %s3 = inlined_call_operand.vmem [shape: s32[8,8,8], index: 3, kind: input, shape index: {}]
  %s4 = inlined_call_operand.hbm [shape: f32[8,8,32], index: 4, kind: output, shape index: {0}]
  %s5 = inlined_call_operand.hbm [shape: f32[8,8,8], index: 5, kind: output, shape index: {1}]
  %6 = xla_tuple %s4, %s5
  %s7 = sld [smem:[#allocation0]]
  $region65: #{tpu_custom_call.1} parent=0
    _
  %s9 = ssub.s32 1, %s7
  %s10 = scalar_select 0, %s9, %s7
  $region1: #{tpu_custom_call.1} parent=0
    #allocation2 [shape = 'u8[32768]{0}', space=vmem, size = 0x8000, scoped, tag = 'input window, operand 1']
    #allocation3 [shape = 's32[2]{0}', space=sflag, size = 0x8, scoped, tag = 'scoped memory for tpu_custom_call.1']
    #allocation4 [shape = 's32[2]{0}', space=sflag, size = 0x8, scoped, tag = 'scoped memory for tpu_custom_call.1']
    #allocation5 [shape = 'u8[32768]{0}', space=vmem, size = 0x8000, scoped, tag = 'input window, operand 2']
    #allocation6 [shape = 's32[2]{0}', space=sflag, size = 0x8, scoped, tag = 'scoped memory for tpu_custom_call.1']
    #allocation7 [shape = 'u8[32768]{0}', space=vmem, size = 0x8000, scoped, tag = 'output window, operand 0']
    #allocation8 [shape = 'u8[32768]{0}', space=vmem, size = 0x8000, scoped, tag = 'output window, operand 1']
    #allocation9 [shape = 's32[2]{0}', space=sflag, size = 0x8, scoped, tag = 'scoped memory for tpu_custom_call.1']
    %11 = vsyncpa [#allocation3], 0
    %s12 = scalar_lea.sflag [#allocation3], 1
    %13 = vsyncpa %s12, 0
    %14 = vsyncpa [#allocation6], 0
    %s15 = scalar_lea.sflag [#allocation6], 1
    %16 = vsyncpa %s15, 0
    %17 = vsyncpa [#allocation4], 0
    %s18 = scalar_lea.sflag [#allocation4], 1
    %19 = vsyncpa %s18, 0
    %20 = vsyncpa [#allocation9], 0
    %s21 = scalar_lea.sflag [#allocation9], 1
    %22 = vsyncpa %s21, 0
    loop: start=0, step=1, limit=4
    $region2: #{tpu_custom_call.1} parent=1 // loop_pre_header
      _
    $region3: #{tpu_custom_call.1} parent=1 // loop_header
      %s24 = sphi 0, %s28
      %p25 = scmp.ge.s32.totalorder %s24, 4
      %s31 = sphi 0, %s43
      %s32 = sphi 0, %s39
      %s33 = sphi 0, %s31
      %s34 = sphi 0, %s32
      %s35 = sphi 0, %s33
      %s36 = sphi 0, %s34
      %s48 = sphi 0, %s50
      %s51 = sphi 0, %s48
      %s52 = sphi 0, %s51
      %s68 = sphi 0, %s52
      %s74 = sphi 0, %s76
      %s77 = sphi 0, %s74
      %s78 = sphi 0, %s77
      %s94 = sphi 0, %s78
      %s100 = sphi 0, %s102
      %s103 = sphi 0, %s100
      %s104 = sphi 0, %s103
      %s120 = sphi 0, %s104
      %s128 = sphi 0, %s130
      %s131 = sphi 0, %s128
      %s132 = sphi 0, %s131
      %s148 = sphi 0, %s132
      %s156 = sphi 0, %s158
      %s159 = sphi 0, %s156
      %s160 = sphi 0, %s159
      %s176 = sphi 0, %s160
      %s184 = sphi 0, %s186
      %s187 = sphi 0, %s184
      %s188 = sphi 0, %s187
      %s204 = sphi 0, %s188
    $region4: #{tpu_custom_call.1} parent=1 // loop_header_branch
      %27 = sbr.rel (%p25) target = $region8
    $region5: #{tpu_custom_call.1} parent=1 // loop_body
      %s29 = ssub.s32 %s24, 1
      %s30 = ssub.s32 %s24, 2
      %s37 = sadd.s32 1, %s32
      %p38 = scmp.ge.s32.totalorder %s37, 1
      %s39 = scalar_select %p38, 0, %s37
      %s40 = sadd.s32 1, %s31
      %s41 = scalar_select %p38, %s40, %s31
      %p42 = scmp.ge.s32.totalorder %s41, 2
      %s43 = scalar_select %p42, 0, %s41
      %s44 = ssub.s32 %s31, %s43
      %s45 = ssub.s32 %s32, %s39
      %s46 = sor.u32 %s44, %s45
      %p47 = scmp.eq.s32.totalorder %s46, 0
      %s49 = sadd.s32 %s48, 1
      %s50 = scalar_select %p47, %s48, %s49
      %p53 = pneg %p47
      %p54 = scmp.eq.s32.totalorder %s24, 1
      %p55 = por %p53, %p54
      %p56 = scmp.ne.s32.totalorder %s48, %s51
      %p57 = scmp.eq.s32.totalorder %s24, 0
      %p58 = por %p56, %p57
      %p59 = scmp.ne.s32.totalorder %s48, %s51
      %p60 = scmp.eq.s32.totalorder %s29, 1
      %p61 = por %p59, %p60
      %p62 = scmp.ne.s32.totalorder %s51, %s52
      %p63 = scmp.eq.s32.totalorder %s29, 0
      %p64 = por %p62, %p63
      %p65 = scmp.ne.s32.totalorder %s51, %s52
      %p66 = scmp.eq.s32.totalorder %s30, 1
      %p67 = por %p65, %p66
      %p69 = scmp.ne.s32.totalorder %s52, %s68
      %p70 = scmp.eq.s32.totalorder %s30, 0
      %p71 = por %p69, %p70
      %s72 = ssub.s32 %s31, %s43
      %p73 = scmp.eq.s32.totalorder %s72, 0
      %s75 = sadd.s32 %s74, 1
      %s76 = scalar_select %p73, %s74, %s75
      %p79 = pneg %p73
      %p80 = scmp.eq.s32.totalorder %s24, 1
      %p81 = por %p79, %p80
      %p82 = scmp.ne.s32.totalorder %s74, %s77
      %p83 = scmp.eq.s32.totalorder %s24, 0
      %p84 = por %p82, %p83
      %p85 = scmp.ne.s32.totalorder %s74, %s77
      %p86 = scmp.eq.s32.totalorder %s29, 1
      %p87 = por %p85, %p86
      %p88 = scmp.ne.s32.totalorder %s77, %s78
      %p89 = scmp.eq.s32.totalorder %s29, 0
      %p90 = por %p88, %p89
      %p91 = scmp.ne.s32.totalorder %s77, %s78
      %p92 = scmp.eq.s32.totalorder %s30, 1
      %p93 = por %p91, %p92
      %p95 = scmp.ne.s32.totalorder %s78, %s94
      %p96 = scmp.eq.s32.totalorder %s30, 0
      %p97 = por %p95, %p96
      %s98 = ssub.s32 %s31, %s43
      %p99 = scmp.eq.s32.totalorder %s98, 0
      %s101 = sadd.s32 %s100, 1
      %s102 = scalar_select %p99, %s100, %s101
      %p105 = pneg %p99
      %p106 = scmp.eq.s32.totalorder %s24, 1
      %p107 = por %p105, %p106
      %p108 = scmp.ne.s32.totalorder %s100, %s103
      %p109 = scmp.eq.s32.totalorder %s24, 0
      %p110 = por %p108, %p109
      %p111 = scmp.ne.s32.totalorder %s100, %s103
      %p112 = scmp.eq.s32.totalorder %s29, 1
      %p113 = por %p111, %p112
      %p114 = scmp.ne.s32.totalorder %s103, %s104
      %p115 = scmp.eq.s32.totalorder %s29, 0
      %p116 = por %p114, %p115
      %p117 = scmp.ne.s32.totalorder %s103, %s104
      %p118 = scmp.eq.s32.totalorder %s30, 1
      %p119 = por %p117, %p118
      %p121 = scmp.ne.s32.totalorder %s104, %s120
      %p122 = scmp.eq.s32.totalorder %s30, 0
      %p123 = por %p121, %p122
      %s124 = ssub.s32 %s31, %s43
      %s125 = ssub.s32 %s32, %s39
      %s126 = sor.u32 %s124, %s125
      %p127 = scmp.eq.s32.totalorder %s126, 0
      %s129 = sadd.s32 %s128, 1
      %s130 = scalar_select %p127, %s128, %s129
      %p133 = pneg %p127
      %p134 = scmp.eq.s32.totalorder %s24, 1
      %p135 = por %p133, %p134
      %p136 = scmp.ne.s32.totalorder %s128, %s131
      %p137 = scmp.eq.s32.totalorder %s24, 0
      %p138 = por %p136, %p137
      %p139 = scmp.ne.s32.totalorder %s128, %s131
      %p140 = scmp.eq.s32.totalorder %s29, 1
      %p141 = por %p139, %p140
      %p142 = scmp.ne.s32.totalorder %s131, %s132
      %p143 = scmp.eq.s32.totalorder %s29, 0
      %p144 = por %p142, %p143
      %p145 = scmp.ne.s32.totalorder %s131, %s132
      %p146 = scmp.eq.s32.totalorder %s30, 1
      %p147 = por %p145, %p146
      %p149 = scmp.ne.s32.totalorder %s132, %s148
      %p150 = scmp.eq.s32.totalorder %s30, 0
      %p151 = por %p149, %p150
      %s152 = ssub.s32 %s31, %s43
      %s153 = ssub.s32 %s32, %s39
      %s154 = sor.u32 %s152, %s153
      %p155 = scmp.eq.s32.totalorder %s154, 0
      %s157 = sadd.s32 %s156, 1
      %s158 = scalar_select %p155, %s156, %s157
      %p161 = pneg %p155
      %p162 = scmp.eq.s32.totalorder %s24, 1
      %p163 = por %p161, %p162
      %p164 = scmp.ne.s32.totalorder %s156, %s159
      %p165 = scmp.eq.s32.totalorder %s24, 0
      %p166 = por %p164, %p165
      %p167 = scmp.ne.s32.totalorder %s156, %s159
      %p168 = scmp.eq.s32.totalorder %s29, 1
      %p169 = por %p167, %p168
      %p170 = scmp.ne.s32.totalorder %s159, %s160
      %p171 = scmp.eq.s32.totalorder %s29, 0
      %p172 = por %p170, %p171
      %p173 = scmp.ne.s32.totalorder %s159, %s160
      %p174 = scmp.eq.s32.totalorder %s30, 1
      %p175 = por %p173, %p174
      %p177 = scmp.ne.s32.totalorder %s160, %s176
      %p178 = scmp.eq.s32.totalorder %s30, 0
      %p179 = por %p177, %p178
      %s180 = ssub.s32 %s31, %s43
      %s181 = ssub.s32 %s32, %s39
      %s182 = sor.u32 %s180, %s181
      %p183 = scmp.eq.s32.totalorder %s182, 0
      %s185 = sadd.s32 %s184, 1
      %s186 = scalar_select %p183, %s184, %s185
      %p189 = pneg %p183
      %p190 = scmp.eq.s32.totalorder %s24, 1
      %p191 = por %p189, %p190
      %p192 = scmp.ne.s32.totalorder %s184, %s187
      %p193 = scmp.eq.s32.totalorder %s24, 0
      %p194 = por %p192, %p193
      %p195 = scmp.ne.s32.totalorder %s184, %s187
      %p196 = scmp.eq.s32.totalorder %s29, 1
      %p197 = por %p195, %p196
      %p198 = scmp.ne.s32.totalorder %s187, %s188
      %p199 = scmp.eq.s32.totalorder %s29, 0
      %p200 = por %p198, %p199
      %p201 = scmp.ne.s32.totalorder %s187, %s188
      %p202 = scmp.eq.s32.totalorder %s30, 1
      %p203 = por %p201, %p202
      %p205 = scmp.ne.s32.totalorder %s188, %s204
      %p206 = scmp.eq.s32.totalorder %s30, 0
      %p207 = por %p205, %p206
      %p208 = scmp.le.s32.totalorder 1, %s24
      %p209 = scmp.lt.s32.totalorder %s24, 3
      %p210 = pnand %p208, %p209
      %p211 = pneg %p210
      // Predicated region
      $region9: #{tpu_custom_call.1} parent=5 // pred_check
        _
      $region10: #{tpu_custom_call.1} parent=5 // pred_check_branch
        %213 = sbr.rel (%p210) target = $region12
      $region11: #{tpu_custom_call.1} parent=5 // pred_region
        %s214 = ssub.s32 %s24, 1
      $region12: #{tpu_custom_call.1} parent=5 // pred_fallthru
        _
      %p215 = scmp.lt.s32.totalorder %s24, 2
      // Predicated region
      $region13: #{tpu_custom_call.1} parent=5 // pred_check
        %p216 = pneg %p215
      $region14: #{tpu_custom_call.1} parent=5 // pred_check_branch
        %218 = sbr.rel (%p216) target = $region16
      $region15: #{tpu_custom_call.1} parent=5 // pred_region
        // Predicated region
        $region17: #{tpu_custom_call.1} parent=15 // pred_check
          %p219 = pneg %p58
        $region18: #{tpu_custom_call.1} parent=15 // pred_check_branch
          %221 = sbr.rel (%p219) target = $region20
        $region19: #{tpu_custom_call.1} parent=15 // pred_region
          %s222 = smul.u32 4, %s31
          %p223 = scmp.lt.s32.totalorder %s222, 7
          %s224 = scalar_select %p223, %s222, 7
          %p225 = scmp.lt.s32.totalorder %s32, 0
          %s226 = scalar_select %p225, %s32, 0
          %s227 = sadd.s32 %s226, %s224
          %s228 = smul.addr %s227, 8
          %s229 = scalar_lea.vmem %s0, %s228
          %s230 = smul.u32 4, %s31
        $region20: #{tpu_custom_call.1} parent=15 // pred_fallthru
          _
        // Predicated region
        $region21: #{tpu_custom_call.1} parent=15 // pred_check
          %p231 = pneg %p84
        $region22: #{tpu_custom_call.1} parent=15 // pred_check_branch
          %233 = sbr.rel (%p231) target = $region24
        $region23: #{tpu_custom_call.1} parent=15 // pred_region
          %s234 = sand.u32 %s74, 1
          %s235 = scalar_lea.sflag [#allocation3], %s234
          %s236 = sand.u32 %s74, 1
          %s237 = smul.addr %s236, 32
          %s238 = scalar_lea.vmem [#allocation2], %s237
          %s239 = smul.u32 4, %s31
          %s241 = ssub.s32 512, 512
          %242 = vsyncadd %s235, %s241
          %s243 = smul.addr %s239, 128
          %s244 = scalar_lea.hbm %s1, %s243
          %s245 = sshll.u32 %s238, 4
          %s246 = int_to_ptr.vmem [resolvable:$true] %s245
          %251 = dma.hbm_to_vmem [thread:$0]  %s244, 512, %s246, %s235, 128, 128, 8
        $region24: #{tpu_custom_call.1} parent=15 // pred_fallthru
          _
        // Predicated region
        $region25: #{tpu_custom_call.1} parent=15 // pred_check
          %p252 = pneg %p110
        $region26: #{tpu_custom_call.1} parent=15 // pred_check_branch
          %254 = sbr.rel (%p252) target = $region28
        $region27: #{tpu_custom_call.1} parent=15 // pred_region
          %s255 = sand.u32 %s100, 1
          %s256 = scalar_lea.sflag [#allocation6], %s255
          %s257 = sand.u32 %s100, 1
          %s258 = smul.addr %s257, 32
          %s259 = scalar_lea.vmem [#allocation5], %s258
          %s260 = smul.u32 4, %s31
          %s262 = ssub.s32 512, 512
          %263 = vsyncadd %s256, %s262
          %s264 = smul.addr %s260, 128
          %s265 = scalar_lea.hbm %s2, %s264
          %s266 = sshll.u32 %s259, 4
          %s267 = int_to_ptr.vmem [resolvable:$true] %s266
          %272 = dma.hbm_to_vmem [thread:$0]  %s265, 512, %s267, %s256, 128, 128, 8
        $region28: #{tpu_custom_call.1} parent=15 // pred_fallthru
          _
        // Predicated region
        $region29: #{tpu_custom_call.1} parent=15 // pred_check
          %p273 = pneg %p138
        $region30: #{tpu_custom_call.1} parent=15 // pred_check_branch
          %275 = sbr.rel (%p273) target = $region32
        $region31: #{tpu_custom_call.1} parent=15 // pred_region
          %s276 = smul.u32 4, %s31
          %p277 = scmp.lt.s32.totalorder %s276, 7
          %s278 = scalar_select %p277, %s276, 7
          %p279 = scmp.lt.s32.totalorder %s32, 0
          %s280 = scalar_select %p279, %s32, 0
          %s281 = sadd.s32 %s280, %s278
          %s282 = smul.addr %s281, 8
          %s283 = scalar_lea.vmem %s3, %s282
          %s284 = smul.u32 4, %s31
        $region32: #{tpu_custom_call.1} parent=15 // pred_fallthru
          _
      $region16: #{tpu_custom_call.1} parent=5 // pred_fallthru
        _
      %p285 = scmp.le.s32.totalorder 1, %s24
      %p286 = scmp.lt.s32.totalorder %s24, 3
      %p287 = pnand %p285, %p286
      %p288 = pneg %p287
      // Predicated region
      $region33: #{tpu_custom_call.1} parent=5 // pred_check
        _
      $region34: #{tpu_custom_call.1} parent=5 // pred_check_branch
        %290 = sbr.rel (%p287) target = $region36
      $region35: #{tpu_custom_call.1} parent=5 // pred_region
        %s291 = ssub.s32 %s24, 1
        %s292 = sand.u32 %s77, 1
        %s293 = scalar_lea.sflag [#allocation3], %s292
        %s294 = sand.u32 %s77, 1
        %s295 = smul.addr %s294, 32
        %s296 = scalar_lea.vmem [#allocation2], %s295
        // Predicated region
        $region37: #{tpu_custom_call.1} parent=35 // pred_check
          %p297 = pneg %p90
        $region38: #{tpu_custom_call.1} parent=35 // pred_check_branch
          %299 = sbr.rel (%p297) target = $region40
        $region39: #{tpu_custom_call.1} parent=35 // pred_region
          %300 = dma.done %s293, 512
        $region40: #{tpu_custom_call.1} parent=35 // pred_fallthru
          _
        %s301 = sand.u32 %s103, 1
        %s302 = scalar_lea.sflag [#allocation6], %s301
        %s303 = sand.u32 %s103, 1
        %s304 = smul.addr %s303, 32
        %s305 = scalar_lea.vmem [#allocation5], %s304
        // Predicated region
        $region41: #{tpu_custom_call.1} parent=35 // pred_check
          %p306 = pneg %p116
        $region42: #{tpu_custom_call.1} parent=35 // pred_check_branch
          %308 = sbr.rel (%p306) target = $region44
        $region43: #{tpu_custom_call.1} parent=35 // pred_region
          %309 = dma.done %s302, 512
        $region44: #{tpu_custom_call.1} parent=35 // pred_fallthru
          _
        %s310 = smul.u32 4, %s33
        %p311 = scmp.lt.s32.totalorder %s310, 7
        %s312 = scalar_select %p311, %s310, 7
        %p313 = scmp.lt.s32.totalorder %s34, 0
        %s314 = scalar_select %p313, %s34, 0
        %s315 = sadd.s32 %s314, %s312
        %s316 = smul.addr %s315, 8
        %s317 = scalar_lea.vmem %s0, %s316
        %p318 = pneg %p64
        %p319 = pneg %p61
        %s320 = sand.u32 %s77, 1
        %s321 = scalar_lea.sflag [#allocation3], %s320
        %s322 = sand.u32 %s77, 1
        %s323 = smul.addr %s322, 32
        %s324 = scalar_lea.vmem [#allocation2], %s323
        %p325 = pneg %p90
        %p326 = pneg %p87
        %s327 = sand.u32 %s103, 1
        %s328 = scalar_lea.sflag [#allocation6], %s327
        %s329 = sand.u32 %s103, 1
        %s330 = smul.addr %s329, 32
        %s331 = scalar_lea.vmem [#allocation5], %s330
        %p332 = pneg %p116
        %p333 = pneg %p113
        %s334 = smul.u32 4, %s33
        %p335 = scmp.lt.s32.totalorder %s334, 7
        %s336 = scalar_select %p335, %s334, 7
        %p337 = scmp.lt.s32.totalorder %s34, 0
        %s338 = scalar_select %p337, %s34, 0
        %s339 = sadd.s32 %s338, %s336
        %s340 = smul.addr %s339, 8
        %s341 = scalar_lea.vmem %s3, %s340
        %p342 = pneg %p144
        %p343 = pneg %p141
        %p344 = pneg %p172
        %p345 = pneg %p169
        %s346 = sand.u32 %s159, 1
        %s347 = scalar_lea.sflag [#allocation4], %s346
        %s348 = sand.u32 %s159, 1
        %s349 = smul.addr %s348, 32
        %s350 = scalar_lea.vmem [#allocation7], %s349
        %p351 = pneg %p200
        %p352 = pneg %p197
        %s353 = sand.u32 %s187, 1
        %s354 = scalar_lea.sflag [#allocation9], %s353
        %s355 = sand.u32 %s187, 1
        %s356 = smul.addr %s355, 32
        %s357 = scalar_lea.vmem [#allocation8], %s356
        %s358 = smul.u32 4, %s33
        %p359 = scmp.lt.s32.totalorder %s358, 7
        %s360 = scalar_select %p359, %s358, 7
        %p361 = scmp.lt.s32.totalorder %s34, 0
        %s362 = scalar_select %p361, %s34, 0
        %s363 = sadd.s32 %s362, %s360
        %s364 = smul.addr %s363, 8
        %s365 = scalar_lea.vmem %s0, %s364
        %s366 = smul.u32 4, %s33
        %s367 = smul.u32 4, %s33
        %s368 = smul.u32 4, %s33
        %s369 = smul.u32 4, %s33
        %p370 = scmp.lt.s32.totalorder %s369, 7
        %s371 = scalar_select %p370, %s369, 7
        %p372 = scmp.lt.s32.totalorder %s34, 0
        %s373 = scalar_select %p372, %s34, 0
        %s374 = sadd.s32 %s373, %s371
        %s375 = smul.addr %s374, 8
        %s376 = scalar_lea.vmem %s3, %s375
        %s377 = smul.u32 4, %s33
        %s378 = smul.u32 4, %s33
        %s379 = smul.u32 4, %s33
        %v380 = vld [vmem:[%s365] sm:$0xff]
        %v381 = vld [vmem:[%s365 + $0x8] sm:$0xff]
        %v382 = vld [vmem:[%s365 + $0x10] sm:$0xff]
        %v383 = vld [vmem:[%s365 + $0x18] sm:$0xff]
        %v384 = vmul.f32 %v380, 0.17677669
        %v385 = vmul.f32 %v381, 0.17677669
        %v386 = vmul.f32 %v382, 0.17677669
        %v387 = vmul.f32 %v383, 0.17677669
        %v388 = vld [vmem:[%s296] sm:$0xff]
        %v389 = vld [vmem:[%s296 + $0x8] sm:$0xff]
        %v390 = vld [vmem:[%s296 + $0x10] sm:$0xff]
        %v391 = vld [vmem:[%s296 + $0x18] sm:$0xff]
        %v392 = vld [vmem:[%s305] sm:$0xff]
        %v393 = vld [vmem:[%s305 + $0x8] sm:$0xff]
        %v394 = vld [vmem:[%s305 + $0x10] sm:$0xff]
        %v395 = vld [vmem:[%s305 + $0x18] sm:$0xff]
        %vm396 = vcmask 261120
        %v398 = vsel %vm396, %v384, 0
        %v401 = vsel %vm396, %v388, 0
        %403 = vmatprep.subr.mxu0 0.0
        %404 = vmatpush1.xpose.msra.mxu0 %v401
        %405 = vmatprep.subr.mxu0 0.0
        %406 = vmatpush1.xpose.msra.mxu0 0.0
        %407 = vmatprep.subr.mxu0 0.0
        %408 = vmatpush1.xpose.msra.mxu0 0.0
        %409 = vmatprep.subr.mxu0 0.0
        %410 = vmatpush1.xpose.msra.mxu0 0.0
        %411 = vmatprep.subr.mxu0 0.0
        %412 = vmatpush1.xpose.msra.mxu0 0.0
        %413 = vmatprep.subr.mxu0 0.0
        %414 = vmatpush1.xpose.msra.mxu0 0.0
        %415 = vmatprep.subr.mxu0 0.0
        %416 = vmatpush1.xpose.msra.mxu0 0.0
        %417 = vmatprep.subr.mxu0 0.0
        %418 = vmatpush1.xpose.msra.mxu0 0.0
        %419 = vmatprep.subr.mxu0 0.0
        %420 = vmatpush1.xpose.msra.mxu0 0.0
        %421 = vmatprep.subr.mxu0 0.0
        %422 = vmatpush1.xpose.msra.mxu0 0.0
        %423 = vmatprep.subr.mxu0 0.0
        %424 = vmatpush1.xpose.msra.mxu0 0.0
        %425 = vmatprep.subr.mxu0 0.0
        %426 = vmatpush1.xpose.msra.mxu0 0.0
        %427 = vmatprep.subr.mxu0 0.0
        %428 = vmatpush1.xpose.msra.mxu0 0.0
        %429 = vmatprep.subr.mxu0 0.0
        %430 = vmatpush1.xpose.msra.mxu0 0.0
        %431 = vmatprep.subr.mxu0 0.0
        %432 = vmatpush1.xpose.msra.mxu0 0.0
        %433 = vmatprep.subr.mxu0 0.0
        %434 = vmatpush1.xpose.msra.mxu0 0.0
        %435 = vmatprep.subr.mxu0 0.0
        %436 = vmatpush1.xpose.msra.mxu0 0.0
        %437 = vmatprep.subr.mxu0 0.0
        %438 = vmatpush1.xpose.msra.mxu0 0.0
        %439 = vmatprep.subr.mxu0 0.0
        %440 = vmatpush1.xpose.msra.mxu0 0.0
        %441 = vmatprep.subr.mxu0 0.0
        %442 = vmatpush1.xpose.msra.mxu0 0.0
        %443 = vmatprep.subr.mxu0 0.0
        %444 = vmatpush1.xpose.msra.mxu0 0.0
        %445 = vmatprep.subr.mxu0 0.0
        %446 = vmatpush1.xpose.msra.mxu0 0.0
        %447 = vmatprep.subr.mxu0 0.0
        %448 = vmatpush1.xpose.msra.mxu0 0.0
        %449 = vmatprep.subr.mxu0 0.0
        %450 = vmatpush1.xpose.msra.mxu0 0.0
        %451 = vmatprep.subr.mxu0 0.0
        %452 = vmatpush1.xpose.msra.mxu0 0.0
        %453 = vmatprep.subr.mxu0 0.0
        %454 = vmatpush1.xpose.msra.mxu0 0.0
        %455 = vmatprep.subr.mxu0 0.0
        %456 = vmatpush1.xpose.msra.mxu0 0.0
        %457 = vmatprep.subr.mxu0 0.0
        %458 = vmatpush1.xpose.msra.mxu0 0.0
        %459 = vmatprep.subr.mxu0 0.0
        %460 = vmatpush1.xpose.msra.mxu0 0.0
        %461 = vmatprep.subr.mxu0 0.0
        %462 = vmatpush1.xpose.msra.mxu0 0.0
        %463 = vmatprep.subr.mxu0 0.0
        %464 = vmatpush1.xpose.msra.mxu0 0.0
        %465 = vmatprep.subr.mxu0 0.0
        %466 = vmatpush1.xpose.msra.mxu0 0.0
        %467 = vmatprep.mubr.f32.mxu0 0.0
        %468 = vmatmul.mubr.f32.gmra.mrb[0].mxu0 %v398
        %v469 = vpop.f32.mrb[0].mxu0
        %v470 = vadd.f32 0.0, %v469
        %v471 = vpop.f32.mrb[0].mxu0
        %472 = vdwg.mxu0
        %v474 = vsel %vm396, %v385, 0
        %v477 = vsel %vm396, %v389, 0
        %479 = vmatprep.subr.mxu0 0.0
        %480 = vmatpush1.xpose.msra.mxu0 %v477
        %481 = vmatprep.subr.mxu0 0.0
        %482 = vmatpush1.xpose.msra.mxu0 0.0
        %483 = vmatprep.subr.mxu0 0.0
        %484 = vmatpush1.xpose.msra.mxu0 0.0
        %485 = vmatprep.subr.mxu0 0.0
        %486 = vmatpush1.xpose.msra.mxu0 0.0
        %487 = vmatprep.subr.mxu0 0.0
        %488 = vmatpush1.xpose.msra.mxu0 0.0
        %489 = vmatprep.subr.mxu0 0.0
        %490 = vmatpush1.xpose.msra.mxu0 0.0
        %491 = vmatprep.subr.mxu0 0.0
        %492 = vmatpush1.xpose.msra.mxu0 0.0
        %493 = vmatprep.subr.mxu0 0.0
        %494 = vmatpush1.xpose.msra.mxu0 0.0
        %495 = vmatprep.subr.mxu0 0.0
        %496 = vmatpush1.xpose.msra.mxu0 0.0
        %497 = vmatprep.subr.mxu0 0.0
        %498 = vmatpush1.xpose.msra.mxu0 0.0
        %499 = vmatprep.subr.mxu0 0.0
        %500 = vmatpush1.xpose.msra.mxu0 0.0
        %501 = vmatprep.subr.mxu0 0.0
        %502 = vmatpush1.xpose.msra.mxu0 0.0
        %503 = vmatprep.subr.mxu0 0.0
        %504 = vmatpush1.xpose.msra.mxu0 0.0
        %505 = vmatprep.subr.mxu0 0.0
        %506 = vmatpush1.xpose.msra.mxu0 0.0
        %507 = vmatprep.subr.mxu0 0.0
        %508 = vmatpush1.xpose.msra.mxu0 0.0
        %509 = vmatprep.subr.mxu0 0.0
        %510 = vmatpush1.xpose.msra.mxu0 0.0
        %511 = vmatprep.subr.mxu0 0.0
        %512 = vmatpush1.xpose.msra.mxu0 0.0
        %513 = vmatprep.subr.mxu0 0.0
        %514 = vmatpush1.xpose.msra.mxu0 0.0
        %515 = vmatprep.subr.mxu0 0.0
        %516 = vmatpush1.xpose.msra.mxu0 0.0
        %517 = vmatprep.subr.mxu0 0.0
        %518 = vmatpush1.xpose.msra.mxu0 0.0
        %519 = vmatprep.subr.mxu0 0.0
        %520 = vmatpush1.xpose.msra.mxu0 0.0
        %521 = vmatprep.subr.mxu0 0.0
        %522 = vmatpush1.xpose.msra.mxu0 0.0
        %523 = vmatprep.subr.mxu0 0.0
        %524 = vmatpush1.xpose.msra.mxu0 0.0
        %525 = vmatprep.subr.mxu0 0.0
        %526 = vmatpush1.xpose.msra.mxu0 0.0
        %527 = vmatprep.subr.mxu0 0.0
        %528 = vmatpush1.xpose.msra.mxu0 0.0
        %529 = vmatprep.subr.mxu0 0.0
        %530 = vmatpush1.xpose.msra.mxu0 0.0
        %531 = vmatprep.subr.mxu0 0.0
        %532 = vmatpush1.xpose.msra.mxu0 0.0
        %533 = vmatprep.subr.mxu0 0.0
        %534 = vmatpush1.xpose.msra.mxu0 0.0
        %535 = vmatprep.subr.mxu0 0.0
        %536 = vmatpush1.xpose.msra.mxu0 0.0
        %537 = vmatprep.subr.mxu0 0.0
        %538 = vmatpush1.xpose.msra.mxu0 0.0
        %539 = vmatprep.subr.mxu0 0.0
        %540 = vmatpush1.xpose.msra.mxu0 0.0
        %541 = vmatprep.subr.mxu0 0.0
        %542 = vmatpush1.xpose.msra.mxu0 0.0
        %543 = vmatprep.mubr.f32.mxu0 0.0
        %544 = vmatmul.mubr.f32.gmra.mrb[0].mxu0 %v474
        %v545 = vpop.f32.mrb[0].mxu0
        %v546 = vadd.f32 0.0, %v545
        %v547 = vpop.f32.mrb[0].mxu0
        %548 = vdwg.mxu0
        %v550 = vsel %vm396, %v386, 0
        %v553 = vsel %vm396, %v390, 0
        %555 = vmatprep.subr.mxu0 0.0
        %556 = vmatpush1.xpose.msra.mxu0 %v553
        %557 = vmatprep.subr.mxu0 0.0
        %558 = vmatpush1.xpose.msra.mxu0 0.0
        %559 = vmatprep.subr.mxu0 0.0
        %560 = vmatpush1.xpose.msra.mxu0 0.0
        %561 = vmatprep.subr.mxu0 0.0
        %562 = vmatpush1.xpose.msra.mxu0 0.0
        %563 = vmatprep.subr.mxu0 0.0
        %564 = vmatpush1.xpose.msra.mxu0 0.0
        %565 = vmatprep.subr.mxu0 0.0
        %566 = vmatpush1.xpose.msra.mxu0 0.0
        %567 = vmatprep.subr.mxu0 0.0
        %568 = vmatpush1.xpose.msra.mxu0 0.0
        %569 = vmatprep.subr.mxu0 0.0
        %570 = vmatpush1.xpose.msra.mxu0 0.0
        %571 = vmatprep.subr.mxu0 0.0
        %572 = vmatpush1.xpose.msra.mxu0 0.0
        %573 = vmatprep.subr.mxu0 0.0
        %574 = vmatpush1.xpose.msra.mxu0 0.0
        %575 = vmatprep.subr.mxu0 0.0
        %576 = vmatpush1.xpose.msra.mxu0 0.0
        %577 = vmatprep.subr.mxu0 0.0
        %578 = vmatpush1.xpose.msra.mxu0 0.0
        %579 = vmatprep.subr.mxu0 0.0
        %580 = vmatpush1.xpose.msra.mxu0 0.0
        %581 = vmatprep.subr.mxu0 0.0
        %582 = vmatpush1.xpose.msra.mxu0 0.0
        %583 = vmatprep.subr.mxu0 0.0
        %584 = vmatpush1.xpose.msra.mxu0 0.0
        %585 = vmatprep.subr.mxu0 0.0
        %586 = vmatpush1.xpose.msra.mxu0 0.0
        %587 = vmatprep.subr.mxu0 0.0
        %588 = vmatpush1.xpose.msra.mxu0 0.0
        %589 = vmatprep.subr.mxu0 0.0
        %590 = vmatpush1.xpose.msra.mxu0 0.0
        %591 = vmatprep.subr.mxu0 0.0
        %592 = vmatpush1.xpose.msra.mxu0 0.0
        %593 = vmatprep.subr.mxu0 0.0
        %594 = vmatpush1.xpose.msra.mxu0 0.0
        %595 = vmatprep.subr.mxu0 0.0
        %596 = vmatpush1.xpose.msra.mxu0 0.0
        %597 = vmatprep.subr.mxu0 0.0
        %598 = vmatpush1.xpose.msra.mxu0 0.0
        %599 = vmatprep.subr.mxu0 0.0
        %600 = vmatpush1.xpose.msra.mxu0 0.0
        %601 = vmatprep.subr.mxu0 0.0
        %602 = vmatpush1.xpose.msra.mxu0 0.0
        %603 = vmatprep.subr.mxu0 0.0
        %604 = vmatpush1.xpose.msra.mxu0 0.0
        %605 = vmatprep.subr.mxu0 0.0
        %606 = vmatpush1.xpose.msra.mxu0 0.0
        %607 = vmatprep.subr.mxu0 0.0
        %608 = vmatpush1.xpose.msra.mxu0 0.0
        %609 = vmatprep.subr.mxu0 0.0
        %610 = vmatpush1.xpose.msra.mxu0 0.0
        %611 = vmatprep.subr.mxu0 0.0
        %612 = vmatpush1.xpose.msra.mxu0 0.0
        %613 = vmatprep.subr.mxu0 0.0
        %614 = vmatpush1.xpose.msra.mxu0 0.0
        %615 = vmatprep.subr.mxu0 0.0
        %616 = vmatpush1.xpose.msra.mxu0 0.0
        %617 = vmatprep.subr.mxu0 0.0
        %618 = vmatpush1.xpose.msra.mxu0 0.0
        %619 = vmatprep.mubr.f32.mxu0 0.0
        %620 = vmatmul.mubr.f32.gmra.mrb[0].mxu0 %v550
        %v621 = vpop.f32.mrb[0].mxu0
        %v622 = vadd.f32 0.0, %v621
        %v623 = vpop.f32.mrb[0].mxu0
        %624 = vdwg.mxu0
        %v626 = vsel %vm396, %v387, 0
        %v629 = vsel %vm396, %v391, 0
        %631 = vmatprep.subr.mxu0 0.0
        %632 = vmatpush1.xpose.msra.mxu0 %v629
        %633 = vmatprep.subr.mxu0 0.0
        %634 = vmatpush1.xpose.msra.mxu0 0.0
        %635 = vmatprep.subr.mxu0 0.0
        %636 = vmatpush1.xpose.msra.mxu0 0.0
        %637 = vmatprep.subr.mxu0 0.0
        %638 = vmatpush1.xpose.msra.mxu0 0.0
        %639 = vmatprep.subr.mxu0 0.0
        %640 = vmatpush1.xpose.msra.mxu0 0.0
        %641 = vmatprep.subr.mxu0 0.0
        %642 = vmatpush1.xpose.msra.mxu0 0.0
        %643 = vmatprep.subr.mxu0 0.0
        %644 = vmatpush1.xpose.msra.mxu0 0.0
        %645 = vmatprep.subr.mxu0 0.0
        %646 = vmatpush1.xpose.msra.mxu0 0.0
        %647 = vmatprep.subr.mxu0 0.0
        %648 = vmatpush1.xpose.msra.mxu0 0.0
        %649 = vmatprep.subr.mxu0 0.0
        %650 = vmatpush1.xpose.msra.mxu0 0.0
        %651 = vmatprep.subr.mxu0 0.0
        %652 = vmatpush1.xpose.msra.mxu0 0.0
        %653 = vmatprep.subr.mxu0 0.0
        %654 = vmatpush1.xpose.msra.mxu0 0.0
        %655 = vmatprep.subr.mxu0 0.0
        %656 = vmatpush1.xpose.msra.mxu0 0.0
        %657 = vmatprep.subr.mxu0 0.0
        %658 = vmatpush1.xpose.msra.mxu0 0.0
        %659 = vmatprep.subr.mxu0 0.0
        %660 = vmatpush1.xpose.msra.mxu0 0.0
        %661 = vmatprep.subr.mxu0 0.0
        %662 = vmatpush1.xpose.msra.mxu0 0.0
        %663 = vmatprep.subr.mxu0 0.0
        %664 = vmatpush1.xpose.msra.mxu0 0.0
        %665 = vmatprep.subr.mxu0 0.0
        %666 = vmatpush1.xpose.msra.mxu0 0.0
        %667 = vmatprep.subr.mxu0 0.0
        %668 = vmatpush1.xpose.msra.mxu0 0.0
        %669 = vmatprep.subr.mxu0 0.0
        %670 = vmatpush1.xpose.msra.mxu0 0.0
        %671 = vmatprep.subr.mxu0 0.0
        %672 = vmatpush1.xpose.msra.mxu0 0.0
        %673 = vmatprep.subr.mxu0 0.0
        %674 = vmatpush1.xpose.msra.mxu0 0.0
        %675 = vmatprep.subr.mxu0 0.0
        %676 = vmatpush1.xpose.msra.mxu0 0.0
        %677 = vmatprep.subr.mxu0 0.0
        %678 = vmatpush1.xpose.msra.mxu0 0.0
        %679 = vmatprep.subr.mxu0 0.0
        %680 = vmatpush1.xpose.msra.mxu0 0.0
        %681 = vmatprep.subr.mxu0 0.0
        %682 = vmatpush1.xpose.msra.mxu0 0.0
        %683 = vmatprep.subr.mxu0 0.0
        %684 = vmatpush1.xpose.msra.mxu0 0.0
        %685 = vmatprep.subr.mxu0 0.0
        %686 = vmatpush1.xpose.msra.mxu0 0.0
        %687 = vmatprep.subr.mxu0 0.0
        %688 = vmatpush1.xpose.msra.mxu0 0.0
        %689 = vmatprep.subr.mxu0 0.0
        %690 = vmatpush1.xpose.msra.mxu0 0.0
        %691 = vmatprep.subr.mxu0 0.0
        %692 = vmatpush1.xpose.msra.mxu0 0.0
        %693 = vmatprep.subr.mxu0 0.0
        %694 = vmatpush1.xpose.msra.mxu0 0.0
        %695 = vmatprep.mubr.f32.mxu0 0.0
        %696 = vmatmul.mubr.f32.gmra.mrb[0].mxu0 %v626
        %v697 = vpop.f32.mrb[0].mxu0
        %v698 = vadd.f32 0.0, %v697
        %v699 = vpop.f32.mrb[0].mxu0
        %700 = vdwg.mxu0
        %v701 = vld [vmem:[%s376] sm:$0xff]
        %v702 = vld [vmem:[%s376 + $0x8] sm:$0xff]
        %v703 = vld [vmem:[%s376 + $0x10] sm:$0xff]
        %v704 = vld [vmem:[%s376 + $0x18] sm:$0xff]
        %vm705 = vcmp.ne.s32.totalorder %v701, 0
        %vm706 = vcmp.ne.s32.totalorder %v702, 0
        %vm707 = vcmp.ne.s32.totalorder %v703, 0
        %vm708 = vcmp.ne.s32.totalorder %v704, 0
        %v709 = vsel %vm705, -1e+09, %v470
        %v710 = vsel %vm706, -1e+09, %v546
        %v711 = vsel %vm707, -1e+09, %v622
        %v712 = vsel %vm708, -1e+09, %v698
        %vm713 = vcmask 64512
        %v714 = vsel %vm713, %v709, -inf
        %715 = vmax.xlane.f32.xlu0 %v714
        %v716 = vpop.xlane.xlu0 %715
        %v717 = vsel %vm713, %v710, -inf
        %718 = vmax.xlane.f32.xlu0 %v717
        %v719 = vpop.xlane.xlu0 %718
        %v720 = vsel %vm713, %v711, -inf
        %721 = vmax.xlane.f32.xlu0 %v720
        %v722 = vpop.xlane.xlu0 %721
        %v723 = vsel %vm713, %v712, -inf
        %724 = vmax.xlane.f32.xlu0 %v723
        %v725 = vpop.xlane.xlu0 %724
        %v726 = vsub.f32 %v709, %v716
        %v727 = vsub.f32 %v710, %v719
        %v728 = vsub.f32 %v711, %v722
        %v729 = vsub.f32 %v712, %v725
        %v730 = vmul.f32 %v726, 1.442695
        %v731 = vpow.pop %v730
        %v732 = vmul.f32 %v727, 1.442695
        %v733 = vpow.pop %v732
        %v734 = vmul.f32 %v728, 1.442695
        %v735 = vpow.pop %v734
        %v736 = vmul.f32 %v729, 1.442695
        %v737 = vpow.pop %v736
        %v738 = vsel %vm713, %v731, 0.0
        %739 = vadd.xlane.f32.xlu0 %v738
        %v740 = vpop.xlane.xlu0 %739
        %v741 = vsel %vm713, %v733, 0.0
        %742 = vadd.xlane.f32.xlu0 %v741
        %v743 = vpop.xlane.xlu0 %742
        %v744 = vsel %vm713, %v735, 0.0
        %745 = vadd.xlane.f32.xlu0 %v744
        %v746 = vpop.xlane.xlu0 %745
        %v747 = vsel %vm713, %v737, 0.0
        %748 = vadd.xlane.f32.xlu0 %v747
        %v749 = vpop.xlane.xlu0 %748
        %v750 = vrcp.pop %v740
        %v751 = vrcp.pop %v743
        %v752 = vrcp.pop %v746
        %v753 = vrcp.pop %v749
        %v754 = vmul.f32 %v731, %v750
        %v755 = vmul.f32 %v733, %v751
        %v756 = vmul.f32 %v735, %v752
        %v757 = vmul.f32 %v737, %v753
        %v759 = vsel %vm713, %v754, 0
        %761 = vmatprep.subr.mxu0 0.0
        %762 = vmatpush1.msra.mxu0 %v392
        %763 = vmatprep.subr.mxu0 0.0
        %764 = vmatpush1.msra.mxu0 0.0
        %765 = vmatprep.subr.mxu0 0.0
        %766 = vmatpush1.msra.mxu0 0.0
        %767 = vmatprep.subr.mxu0 0.0
        %768 = vmatpush1.msra.mxu0 0.0
        %769 = vmatprep.subr.mxu0 0.0
        %770 = vmatpush1.msra.mxu0 0.0
        %771 = vmatprep.subr.mxu0 0.0
        %772 = vmatpush1.msra.mxu0 0.0
        %773 = vmatprep.subr.mxu0 0.0
        %774 = vmatpush1.msra.mxu0 0.0
        %775 = vmatprep.subr.mxu0 0.0
        %776 = vmatpush1.msra.mxu0 0.0
        %777 = vmatprep.subr.mxu0 0.0
        %778 = vmatpush1.msra.mxu0 0.0
        %779 = vmatprep.subr.mxu0 0.0
        %780 = vmatpush1.msra.mxu0 0.0
        %781 = vmatprep.subr.mxu0 0.0
        %782 = vmatpush1.msra.mxu0 0.0
        %783 = vmatprep.subr.mxu0 0.0
        %784 = vmatpush1.msra.mxu0 0.0
        %785 = vmatprep.subr.mxu0 0.0
        %786 = vmatpush1.msra.mxu0 0.0
        %787 = vmatprep.subr.mxu0 0.0
        %788 = vmatpush1.msra.mxu0 0.0
        %789 = vmatprep.subr.mxu0 0.0
        %790 = vmatpush1.msra.mxu0 0.0
        %791 = vmatprep.subr.mxu0 0.0
        %792 = vmatpush1.msra.mxu0 0.0
        %793 = vmatprep.subr.mxu0 0.0
        %794 = vmatpush1.msra.mxu0 0.0
        %795 = vmatprep.subr.mxu0 0.0
        %796 = vmatpush1.msra.mxu0 0.0
        %797 = vmatprep.subr.mxu0 0.0
        %798 = vmatpush1.msra.mxu0 0.0
        %799 = vmatprep.subr.mxu0 0.0
        %800 = vmatpush1.msra.mxu0 0.0
        %801 = vmatprep.subr.mxu0 0.0
        %802 = vmatpush1.msra.mxu0 0.0
        %803 = vmatprep.subr.mxu0 0.0
        %804 = vmatpush1.msra.mxu0 0.0
        %805 = vmatprep.subr.mxu0 0.0
        %806 = vmatpush1.msra.mxu0 0.0
        %807 = vmatprep.subr.mxu0 0.0
        %808 = vmatpush1.msra.mxu0 0.0
        %809 = vmatprep.subr.mxu0 0.0
        %810 = vmatpush1.msra.mxu0 0.0
        %811 = vmatprep.subr.mxu0 0.0
        %812 = vmatpush1.msra.mxu0 0.0
        %813 = vmatprep.subr.mxu0 0.0
        %814 = vmatpush1.msra.mxu0 0.0
        %815 = vmatprep.subr.mxu0 0.0
        %816 = vmatpush1.msra.mxu0 0.0
        %817 = vmatprep.subr.mxu0 0.0
        %818 = vmatpush1.msra.mxu0 0.0
        %819 = vmatprep.subr.mxu0 0.0
        %820 = vmatpush1.msra.mxu0 0.0
        %821 = vmatprep.subr.mxu0 0.0
        %822 = vmatpush1.msra.mxu0 0.0
        %823 = vmatprep.subr.mxu0 0.0
        %824 = vmatpush1.msra.mxu0 0.0
        %825 = vmatprep.mubr.f32.mxu0 0.0
        %826 = vmatmul.mubr.f32.gmra.mrb[0].mxu0 %v759
        %v827 = vpop.f32.mrb[0].mxu0
        %v828 = vadd.f32 0.0, %v827
        %v829 = vpop.f32.mrb[0].mxu0
        %830 = vdwg.mxu0
        %v832 = vsel %vm713, %v755, 0
        %834 = vmatprep.subr.mxu0 0.0
        %835 = vmatpush1.msra.mxu0 %v393
        %836 = vmatprep.subr.mxu0 0.0
        %837 = vmatpush1.msra.mxu0 0.0
        %838 = vmatprep.subr.mxu0 0.0
        %839 = vmatpush1.msra.mxu0 0.0
        %840 = vmatprep.subr.mxu0 0.0
        %841 = vmatpush1.msra.mxu0 0.0
        %842 = vmatprep.subr.mxu0 0.0
        %843 = vmatpush1.msra.mxu0 0.0
        %844 = vmatprep.subr.mxu0 0.0
        %845 = vmatpush1.msra.mxu0 0.0
        %846 = vmatprep.subr.mxu0 0.0
        %847 = vmatpush1.msra.mxu0 0.0
        %848 = vmatprep.subr.mxu0 0.0
        %849 = vmatpush1.msra.mxu0 0.0
        %850 = vmatprep.subr.mxu0 0.0
        %851 = vmatpush1.msra.mxu0 0.0
        %852 = vmatprep.subr.mxu0 0.0
        %853 = vmatpush1.msra.mxu0 0.0
        %854 = vmatprep.subr.mxu0 0.0
        %855 = vmatpush1.msra.mxu0 0.0
        %856 = vmatprep.subr.mxu0 0.0
        %857 = vmatpush1.msra.mxu0 0.0
        %858 = vmatprep.subr.mxu0 0.0
        %859 = vmatpush1.msra.mxu0 0.0
        %860 = vmatprep.subr.mxu0 0.0
        %861 = vmatpush1.msra.mxu0 0.0
        %862 = vmatprep.subr.mxu0 0.0
        %863 = vmatpush1.msra.mxu0 0.0
        %864 = vmatprep.subr.mxu0 0.0
        %865 = vmatpush1.msra.mxu0 0.0
        %866 = vmatprep.subr.mxu0 0.0
        %867 = vmatpush1.msra.mxu0 0.0
        %868 = vmatprep.subr.mxu0 0.0
        %869 = vmatpush1.msra.mxu0 0.0
        %870 = vmatprep.subr.mxu0 0.0
        %871 = vmatpush1.msra.mxu0 0.0
        %872 = vmatprep.subr.mxu0 0.0
        %873 = vmatpush1.msra.mxu0 0.0
        %874 = vmatprep.subr.mxu0 0.0
        %875 = vmatpush1.msra.mxu0 0.0
        %876 = vmatprep.subr.mxu0 0.0
        %877 = vmatpush1.msra.mxu0 0.0
        %878 = vmatprep.subr.mxu0 0.0
        %879 = vmatpush1.msra.mxu0 0.0
        %880 = vmatprep.subr.mxu0 0.0
        %881 = vmatpush1.msra.mxu0 0.0
        %882 = vmatprep.subr.mxu0 0.0
        %883 = vmatpush1.msra.mxu0 0.0
        %884 = vmatprep.subr.mxu0 0.0
        %885 = vmatpush1.msra.mxu0 0.0
        %886 = vmatprep.subr.mxu0 0.0
        %887 = vmatpush1.msra.mxu0 0.0
        %888 = vmatprep.subr.mxu0 0.0
        %889 = vmatpush1.msra.mxu0 0.0
        %890 = vmatprep.subr.mxu0 0.0
        %891 = vmatpush1.msra.mxu0 0.0
        %892 = vmatprep.subr.mxu0 0.0
        %893 = vmatpush1.msra.mxu0 0.0
        %894 = vmatprep.subr.mxu0 0.0
        %895 = vmatpush1.msra.mxu0 0.0
        %896 = vmatprep.subr.mxu0 0.0
        %897 = vmatpush1.msra.mxu0 0.0
        %898 = vmatprep.mubr.f32.mxu0 0.0
        %899 = vmatmul.mubr.f32.gmra.mrb[0].mxu0 %v832
        %v900 = vpop.f32.mrb[0].mxu0
        %v901 = vadd.f32 0.0, %v900
        %v902 = vpop.f32.mrb[0].mxu0
        %903 = vdwg.mxu0
        %v905 = vsel %vm713, %v756, 0
        %907 = vmatprep.subr.mxu0 0.0
        %908 = vmatpush1.msra.mxu0 %v394
        %909 = vmatprep.subr.mxu0 0.0
        %910 = vmatpush1.msra.mxu0 0.0
        %911 = vmatprep.subr.mxu0 0.0
        %912 = vmatpush1.msra.mxu0 0.0
        %913 = vmatprep.subr.mxu0 0.0
        %914 = vmatpush1.msra.mxu0 0.0
        %915 = vmatprep.subr.mxu0 0.0
        %916 = vmatpush1.msra.mxu0 0.0
        %917 = vmatprep.subr.mxu0 0.0
        %918 = vmatpush1.msra.mxu0 0.0
        %919 = vmatprep.subr.mxu0 0.0
        %920 = vmatpush1.msra.mxu0 0.0
        %921 = vmatprep.subr.mxu0 0.0
        %922 = vmatpush1.msra.mxu0 0.0
        %923 = vmatprep.subr.mxu0 0.0
        %924 = vmatpush1.msra.mxu0 0.0
        %925 = vmatprep.subr.mxu0 0.0
        %926 = vmatpush1.msra.mxu0 0.0
        %927 = vmatprep.subr.mxu0 0.0
        %928 = vmatpush1.msra.mxu0 0.0
        %929 = vmatprep.subr.mxu0 0.0
        %930 = vmatpush1.msra.mxu0 0.0
        %931 = vmatprep.subr.mxu0 0.0
        %932 = vmatpush1.msra.mxu0 0.0
        %933 = vmatprep.subr.mxu0 0.0
        %934 = vmatpush1.msra.mxu0 0.0
        %935 = vmatprep.subr.mxu0 0.0
        %936 = vmatpush1.msra.mxu0 0.0
        %937 = vmatprep.subr.mxu0 0.0
        %938 = vmatpush1.msra.mxu0 0.0
        %939 = vmatprep.subr.mxu0 0.0
        %940 = vmatpush1.msra.mxu0 0.0
        %941 = vmatprep.subr.mxu0 0.0
        %942 = vmatpush1.msra.mxu0 0.0
        %943 = vmatprep.subr.mxu0 0.0
        %944 = vmatpush1.msra.mxu0 0.0
        %945 = vmatprep.subr.mxu0 0.0
        %946 = vmatpush1.msra.mxu0 0.0
        %947 = vmatprep.subr.mxu0 0.0
        %948 = vmatpush1.msra.mxu0 0.0
        %949 = vmatprep.subr.mxu0 0.0
        %950 = vmatpush1.msra.mxu0 0.0
        %951 = vmatprep.subr.mxu0 0.0
        %952 = vmatpush1.msra.mxu0 0.0
        %953 = vmatprep.subr.mxu0 0.0
        %954 = vmatpush1.msra.mxu0 0.0
        %955 = vmatprep.subr.mxu0 0.0
        %956 = vmatpush1.msra.mxu0 0.0
        %957 = vmatprep.subr.mxu0 0.0
        %958 = vmatpush1.msra.mxu0 0.0
        %959 = vmatprep.subr.mxu0 0.0
        %960 = vmatpush1.msra.mxu0 0.0
        %961 = vmatprep.subr.mxu0 0.0
        %962 = vmatpush1.msra.mxu0 0.0
        %963 = vmatprep.subr.mxu0 0.0
        %964 = vmatpush1.msra.mxu0 0.0
        %965 = vmatprep.subr.mxu0 0.0
        %966 = vmatpush1.msra.mxu0 0.0
        %967 = vmatprep.subr.mxu0 0.0
        %968 = vmatpush1.msra.mxu0 0.0
        %969 = vmatprep.subr.mxu0 0.0
        %970 = vmatpush1.msra.mxu0 0.0
        %971 = vmatprep.mubr.f32.mxu0 0.0
        %972 = vmatmul.mubr.f32.gmra.mrb[0].mxu0 %v905
        %v973 = vpop.f32.mrb[0].mxu0
        %v974 = vadd.f32 0.0, %v973
        %v975 = vpop.f32.mrb[0].mxu0
        %976 = vdwg.mxu0
        %v978 = vsel %vm713, %v757, 0
        %980 = vmatprep.subr.mxu0 0.0
        %981 = vmatpush1.msra.mxu0 %v395
        %982 = vmatprep.subr.mxu0 0.0
        %983 = vmatpush1.msra.mxu0 0.0
        %984 = vmatprep.subr.mxu0 0.0
        %985 = vmatpush1.msra.mxu0 0.0
        %986 = vmatprep.subr.mxu0 0.0
        %987 = vmatpush1.msra.mxu0 0.0
        %988 = vmatprep.subr.mxu0 0.0
        %989 = vmatpush1.msra.mxu0 0.0
        %990 = vmatprep.subr.mxu0 0.0
        %991 = vmatpush1.msra.mxu0 0.0
        %992 = vmatprep.subr.mxu0 0.0
        %993 = vmatpush1.msra.mxu0 0.0
        %994 = vmatprep.subr.mxu0 0.0
        %995 = vmatpush1.msra.mxu0 0.0
        %996 = vmatprep.subr.mxu0 0.0
        %997 = vmatpush1.msra.mxu0 0.0
        %998 = vmatprep.subr.mxu0 0.0
        %999 = vmatpush1.msra.mxu0 0.0
        %1000 = vmatprep.subr.mxu0 0.0
        %1001 = vmatpush1.msra.mxu0 0.0
        %1002 = vmatprep.subr.mxu0 0.0
        %1003 = vmatpush1.msra.mxu0 0.0
        %1004 = vmatprep.subr.mxu0 0.0
        %1005 = vmatpush1.msra.mxu0 0.0
        %1006 = vmatprep.subr.mxu0 0.0
        %1007 = vmatpush1.msra.mxu0 0.0
        %1008 = vmatprep.subr.mxu0 0.0
        %1009 = vmatpush1.msra.mxu0 0.0
        %1010 = vmatprep.subr.mxu0 0.0
        %1011 = vmatpush1.msra.mxu0 0.0
        %1012 = vmatprep.subr.mxu0 0.0
        %1013 = vmatpush1.msra.mxu0 0.0
        %1014 = vmatprep.subr.mxu0 0.0
        %1015 = vmatpush1.msra.mxu0 0.0
        %1016 = vmatprep.subr.mxu0 0.0
        %1017 = vmatpush1.msra.mxu0 0.0
        %1018 = vmatprep.subr.mxu0 0.0
        %1019 = vmatpush1.msra.mxu0 0.0
        %1020 = vmatprep.subr.mxu0 0.0
        %1021 = vmatpush1.msra.mxu0 0.0
        %1022 = vmatprep.subr.mxu0 0.0
        %1023 = vmatpush1.msra.mxu0 0.0
        %1024 = vmatprep.subr.mxu0 0.0
        %1025 = vmatpush1.msra.mxu0 0.0
        %1026 = vmatprep.subr.mxu0 0.0
        %1027 = vmatpush1.msra.mxu0 0.0
        %1028 = vmatprep.subr.mxu0 0.0
        %1029 = vmatpush1.msra.mxu0 0.0
        %1030 = vmatprep.subr.mxu0 0.0
        %1031 = vmatpush1.msra.mxu0 0.0
        %1032 = vmatprep.subr.mxu0 0.0
        %1033 = vmatpush1.msra.mxu0 0.0
        %1034 = vmatprep.subr.mxu0 0.0
        %1035 = vmatpush1.msra.mxu0 0.0
        %1036 = vmatprep.subr.mxu0 0.0
        %1037 = vmatpush1.msra.mxu0 0.0
        %1038 = vmatprep.subr.mxu0 0.0
        %1039 = vmatpush1.msra.mxu0 0.0
        %1040 = vmatprep.subr.mxu0 0.0
        %1041 = vmatpush1.msra.mxu0 0.0
        %1042 = vmatprep.subr.mxu0 0.0
        %1043 = vmatpush1.msra.mxu0 0.0
        %1044 = vmatprep.mubr.f32.mxu0 0.0
        %1045 = vmatmul.mubr.f32.gmra.mrb[0].mxu0 %v978
        %v1046 = vpop.f32.mrb[0].mxu0
        %v1047 = vadd.f32 0.0, %v1046
        %v1048 = vpop.f32.mrb[0].mxu0
        %1049 = vdwg.mxu0
        %1050 = vst.msk [vmem:[%s357] sm:$0xff] %vm713, %v754
        %1051 = vst.msk [vmem:[%s357 + $0x8] sm:$0xff] %vm713, %v755
        %1052 = vst.msk [vmem:[%s357 + $0x10] sm:$0xff] %vm713, %v756
        %1053 = vst.msk [vmem:[%s357 + $0x18] sm:$0xff] %vm713, %v757
        %1054 = vst.msk [vmem:[%s350] sm:$0xff] %vm396, %v828
        %1055 = vst.msk [vmem:[%s350 + $0x8] sm:$0xff] %vm396, %v901
        %1056 = vst.msk [vmem:[%s350 + $0x10] sm:$0xff] %vm396, %v974
        %1057 = vst.msk [vmem:[%s350 + $0x18] sm:$0xff] %vm396, %v1047
        %s1058 = sand.u32 %s159, 1
        %s1059 = scalar_lea.sflag [#allocation4], %s1058
        %s1060 = sand.u32 %s159, 1
        %s1061 = smul.addr %s1060, 32
        %s1062 = scalar_lea.vmem [#allocation7], %s1061
        %s1063 = sand.u32 %s187, 1
        %s1064 = scalar_lea.sflag [#allocation9], %s1063
        %s1065 = sand.u32 %s187, 1
        %s1066 = smul.addr %s1065, 32
        %s1067 = scalar_lea.vmem [#allocation8], %s1066
        // Predicated region
        $region45: #{tpu_custom_call.1} parent=35 // pred_check
          %p1068 = pneg %p169
        $region46: #{tpu_custom_call.1} parent=35 // pred_check_branch
          %1070 = sbr.rel (%p1068) target = $region48
        $region47: #{tpu_custom_call.1} parent=35 // pred_region
          %s1071 = smul.u32 4, %s33
          %s1073 = ssub.s32 512, 512
          %1074 = vsyncadd %s1059, %s1073
          %s1075 = sadd.s32 %s34, %s1071
          %s1076 = smul.addr %s1075, 128
          %s1077 = scalar_lea.hbm %s4, %s1076
          %s1078 = sshll.u32 %s1062, 4
          %s1079 = int_to_ptr.vmem [resolvable:$true] %s1078
          %1084 = dma.vmem_to_hbm [thread:$0]  %s1079, 512, %s1077, %s1059, 128, 128, 8
        $region48: #{tpu_custom_call.1} parent=35 // pred_fallthru
          _
        // Predicated region
        $region49: #{tpu_custom_call.1} parent=35 // pred_check
          %p1085 = pneg %p197
        $region50: #{tpu_custom_call.1} parent=35 // pred_check_branch
          %1087 = sbr.rel (%p1085) target = $region52
        $region51: #{tpu_custom_call.1} parent=35 // pred_region
          %s1088 = smul.u32 4, %s33
          %s1090 = ssub.s32 512, 512
          %1091 = vsyncadd %s1064, %s1090
          %s1092 = sadd.s32 %s34, %s1088
          %s1093 = smul.addr %s1092, 128
          %s1094 = scalar_lea.hbm %s5, %s1093
          %s1095 = sshll.u32 %s1067, 4
          %s1096 = int_to_ptr.vmem [resolvable:$true] %s1095
          %1101 = dma.vmem_to_hbm [thread:$0]  %s1096, 512, %s1094, %s1064, 128, 128, 8
        $region52: #{tpu_custom_call.1} parent=35 // pred_fallthru
          _
      $region36: #{tpu_custom_call.1} parent=5 // pred_fallthru
        _
      %p1102 = scmp.le.s32.totalorder 2, %s24
      // Predicated region
      $region53: #{tpu_custom_call.1} parent=5 // pred_check
        %p1103 = pneg %p1102
      $region54: #{tpu_custom_call.1} parent=5 // pred_check_branch
        %1105 = sbr.rel (%p1103) target = $region56
      $region55: #{tpu_custom_call.1} parent=5 // pred_region
        %s1106 = ssub.s32 %s24, 2
        // Predicated region
        $region57: #{tpu_custom_call.1} parent=55 // pred_check
          %p1107 = pneg %p175
        $region58: #{tpu_custom_call.1} parent=55 // pred_check_branch
          %1109 = sbr.rel (%p1107) target = $region60
        $region59: #{tpu_custom_call.1} parent=55 // pred_region
          %s1110 = sand.u32 %s160, 1
          %s1111 = scalar_lea.sflag [#allocation4], %s1110
          %s1112 = sand.u32 %s160, 1
          %s1113 = smul.addr %s1112, 32
          %s1114 = scalar_lea.vmem [#allocation7], %s1113
          %1115 = dma.done %s1111, 512
        $region60: #{tpu_custom_call.1} parent=55 // pred_fallthru
          _
        // Predicated region
        $region61: #{tpu_custom_call.1} parent=55 // pred_check
          %p1116 = pneg %p203
        $region62: #{tpu_custom_call.1} parent=55 // pred_check_branch
          %1118 = sbr.rel (%p1116) target = $region64
        $region63: #{tpu_custom_call.1} parent=55 // pred_region
          %s1119 = sand.u32 %s188, 1
          %s1120 = scalar_lea.sflag [#allocation9], %s1119
          %s1121 = sand.u32 %s188, 1
          %s1122 = smul.addr %s1121, 32
          %s1123 = scalar_lea.vmem [#allocation8], %s1122
          %1124 = dma.done %s1120, 512
        $region64: #{tpu_custom_call.1} parent=55 // pred_fallthru
          _
      $region56: #{tpu_custom_call.1} parent=5 // pred_fallthru
        _
    $region6: #{tpu_custom_call.1} parent=1 // loop_footer
      %s28 = sadd.s32 1, %s24
    $region7: #{tpu_custom_call.1} parent=1 // loop_footer_branch
      %23 = sbr.rel target = $region3
    $region8: #{tpu_custom_call.1} parent=1 // loop_exit
      _
    %1125 = vsyncpa [#allocation3], 1
    %s1126 = scalar_lea.sflag [#allocation3], 1
    %1127 = vsyncpa %s1126, 1
    %1128 = vsyncpa [#allocation6], 1
    %s1129 = scalar_lea.sflag [#allocation6], 1
    %1130 = vsyncpa %s1129, 1
    %1131 = vsyncpa [#allocation4], 1
    %s1132 = scalar_lea.sflag [#allocation4], 1
    %1133 = vsyncpa %s1132, 1
    %1134 = vsyncpa [#allocation9], 1
    %s1135 = scalar_lea.sflag [#allocation9], 1
    %1136 = vsyncpa %s1135, 1

</llo_original>
